<compile_context>
chip_gen: v7x
topology: tpu7x:2x2x1
jax: 0.10.0
libtpu: 0.0.40
codegen_flags: <defaults>
</compile_context>

<pallas_src>
import jax
import jax.numpy as jnp
from jax.experimental import pallas as pl
from jax.experimental.pallas import tpu as pltpu

LANE = 128                  # vreg lane width
TILE_ROWS = 2048            # (2048, 128) f32 block = 1 MiB per buffer
_PALLAS_MIN_ELEMS = 16384   # below this, pallas_call launch overhead dominates


def _round_up(v, m):
    return ((v + m - 1) // m) * m


def _affine_kernel(params_ref, x_ref, o_ref):
    # params_ref: (2,) f32 in SMEM -> [weight, bias] scalars.
    # x_ref / o_ref: (tile_rows, 128) f32 VMEM tiles (last block may be
    # partial; Pallas masks the ragged edge).
    o_ref[...] = x_ref[...] * params_ref[0] + params_ref[1]


def _pallas_affine_lane_dense(x2d, params):
    """y = x*w + b over a (rows, 128) f32 array: lane-dense, tiled, pipelined."""
    rows = x2d.shape[0]
    # >= 2 grid steps (megacore sharding on v7x; hides fixed per-step
    # overhead), capped at TILE_ROWS, multiple of 8 (f32 sublane).
    tile_rows = max(8, min(TILE_ROWS, _round_up(pl.cdiv(rows, 2), 8)))
    grid = (pl.cdiv(rows, tile_rows),)

    return pl.pallas_call(
        _affine_kernel,
        out_shape=jax.ShapeDtypeStruct((rows, LANE), x2d.dtype),
        grid=grid,
        in_specs=[
            pl.BlockSpec(memory_space=pltpu.MemorySpace.SMEM),   # [w, b] scalars
            pl.BlockSpec((tile_rows, LANE), lambda i: (i, 0)),
        ],
        out_specs=pl.BlockSpec((tile_rows, LANE), lambda i: (i, 0)),
        compiler_params=pltpu.CompilerParams(
            dimension_semantics=("parallel",),
            vmem_limit_bytes=32 * 1024 * 1024,   # v5e scoped default is 16 MiB
        ),
    )(params, x2d)


def regression_model_forward(x, weight, bias):
    """x: (N, 1) f32, weight: (1, 1) f32, bias: (1,) f32 -> (N, 1) f32."""
    n_elems = x.shape[0] * x.shape[1]
    if n_elems >= _PALLAS_MIN_ELEMS and n_elems % LANE == 0:
        # Copy-free Pallas path: flatten/reshape to a lane-dense (rows, 128)
        # view (free for contiguous data), stream through the kernel,
        # reshape back (also free).
        params = jnp.concatenate(
            [weight.reshape(1), bias.reshape(1)]).astype(jnp.float32)
        x2d = x.reshape(n_elems // LANE, LANE)
        y2d = _pallas_affine_lane_dense(x2d, params)
        return y2d.reshape(x.shape)
    # Ragged or tiny N: a fused XLA x*w + b is already copy-free and at HBM
    # roofline; going through Pallas would only add pad/slice passes or
    # launch overhead.
    return x * weight[0, 0] + bias[0]


if __name__ == "__main__":
    key = jax.random.PRNGKey(0)
    kx1, kx2, kx3, kw, kb = jax.random.split(key, 5)

    # nn.Linear(1, 1): weight (1, 1), bias (1,); PyTorch default init for
    # fan_in=1 is U(-1, 1).
    weight = jax.random.uniform(kw, (1, 1), jnp.float32, minval=-1.0, maxval=1.0)
    bias = jax.random.uniform(kb, (1,), jnp.float32, minval=-1.0, maxval=1.0)

    # 1) Small batch (matches the nn.Linear(1,1) spec): XLA fast path.
    x_small = jax.random.normal(kx1, (8, 1), jnp.float32)
    out_small = jax.block_until_ready(regression_model_forward(x_small, weight, bias))
    ref_small = x_small @ weight.T + bias
    assert out_small.shape == (8, 1)
    assert jnp.allclose(out_small, ref_small, atol=1e-6, rtol=1e-6)

    # 2) Ragged batch (N % 128 != 0): dispatcher falls through to the fused
    #    XLA affine (copy-free), still bit-exact vs. the reference.
    n_ragged = 70013
    x_ragged = jax.random.normal(kx2, (n_ragged, 1), jnp.float32)
    out_ragged = jax.block_until_ready(regression_model_forward(x_ragged, weight, bias))
    ref_ragged = x_ragged @ weight.T + bias
    assert out_ragged.shape == (n_ragged, 1)
    assert jnp.allclose(out_ragged, ref_ragged, atol=1e-6, rtol=1e-6)

    # 3) Lane-divisible batch, rows not a multiple of tile_rows: exercises the
    #    copy-free Pallas path with 2 grid steps and a masked partial last block.
    n_big = 128 * 547  # rows = 547 -> tile_rows = 280, grid = 2 (partial tail)
    x_big = jax.random.normal(kx3, (n_big, 1), jnp.float32)
    out_big = jax.block_until_ready(regression_model_forward(x_big, weight, bias))
    ref_big = x_big @ weight.T + bias
    assert out_big.shape == (n_big, 1)
    assert jnp.allclose(out_big, ref_big, atol=1e-6, rtol=1e-6)

    # 4) Larger batch hitting full-size (2048, 128) tiles: grid = 4 full blocks.
    n_huge = 8192 * 128
    x_huge = jax.random.normal(kx3, (n_huge, 1), jnp.float32)
    out_huge = jax.block_until_ready(regression_model_forward(x_huge, weight, bias))
    ref_huge = x_huge @ weight.T + bias
    assert out_huge.shape == (n_huge, 1)
    assert jnp.allclose(out_huge, ref_huge, atol=1e-6, rtol=1e-6)

    print("KERNEL_OK")
</pallas_src>

<mosaic_0001>
module attributes {stable_mosaic.version = 11 : i64} {
  func.func @_affine_kernel(%arg0: i32, %arg1: memref<2xf32, #tpu.memory_space<smem>>, %arg2: memref<280x128xf32, #tpu.memory_space<vmem>>, %arg3: memref<280x128xf32, #tpu.memory_space<vmem>>) attributes {dimension_semantics = [#tpu.dimension_semantics<parallel>], iteration_bounds = array<i64: 2>, scalar_prefetch = 0 : i64, scratch_operands = 0 : i64, tpu.core_type = #tpu.core_type<tc>, window_params = [{transform_indices = @transform_0, window_bounds = array<i64: 2>}, {transform_indices = @transform_1, window_bounds = array<i64: 280, 128>}, {transform_indices = @transform_2, window_bounds = array<i64: 280, 128>}]} {
    %c0 = arith.constant 0 : index
    %c0_0 = arith.constant 0 : index
    %0 = vector.load %arg2[%c0, %c0_0] : memref<280x128xf32, #tpu.memory_space<vmem>>, vector<280x128xf32>
    %c0_1 = arith.constant 0 : index
    %1 = memref.load %arg1[%c0_1] : memref<2xf32, #tpu.memory_space<smem>>
    %2 = vector.broadcast %1 : f32 to vector<280x128xf32>
    %3 = arith.mulf %0, %2 : vector<280x128xf32>
    %c1 = arith.constant 1 : index
    %4 = memref.load %arg1[%c1] : memref<2xf32, #tpu.memory_space<smem>>
    %5 = vector.broadcast %4 : f32 to vector<280x128xf32>
    %6 = arith.addf %3, %5 : vector<280x128xf32>
    %c0_2 = arith.constant 0 : index
    %c0_3 = arith.constant 0 : index
    %7 = vector.load %arg3[%c0_2, %c0_3] : memref<280x128xf32, #tpu.memory_space<vmem>>, vector<280x128xf32>
    tpu.vector_store %arg3[%c0_2, %c0_3], %6 {strides = array<i32>} : memref<280x128xf32, #tpu.memory_space<vmem>>, vector<280x128xf32>,
    return
  }
  func.func @transform_0(%arg0: i32) -> i32 {
    %c0_i32 = arith.constant 0 : i32
    %c0_i32_0 = arith.constant 0 : i32
    return %c0_i32 : i32
  }
  func.func @transform_1(%arg0: i32) -> (i32, i32) {
    %c0_i32 = arith.constant 0 : i32
    %c0_i32_0 = arith.constant 0 : i32
    return %arg0, %c0_i32 : i32, i32
  }
  func.func @transform_2(%arg0: i32) -> (i32, i32) {
    %c0_i32 = arith.constant 0 : i32
    %c0_i32_0 = arith.constant 0 : i32
    return %arg0, %c0_i32 : i32, i32
  }
}

</mosaic_0001>

<llo_original>
// kernel: tpu_custom_call.1
$region0: #{tpu_custom_call.1}
  #allocation0 [shape = 'u32[]', space=smem, size = 0x4, offset = 0x4, fixed_abs, tag = 'smem constant byte address 0x4 - core index']
  #allocation1 [shape = 'u32[144,128]{1,0:T(1,128)}', space=vmem, size = 0x12000, scoped, tag = 'internal scratch']
  %s0 = inlined_call_operand.hbm [shape: f32[2], index: 0, kind: input, shape index: {}]
  %s1 = inlined_call_operand.hbm [shape: f32[547,128], index: 1, kind: input, shape index: {}]
  %s2 = inlined_call_operand.hbm [shape: f32[547,128], index: 2, kind: output, shape index: {}]
  %s3 = sld [smem:[#allocation0]]
  $region49: #{tpu_custom_call.1} parent=0
    _
  %s5 = ssub.s32 1, %s3
  %s6 = scalar_select 0, %s5, %s3
  $region1: #{tpu_custom_call.1} parent=0
    #allocation2 [shape = 'u8[512]{0}', space=smem, size = 0x200, scoped, tag = 'input window, operand 0, single buffered']
    #allocation3 [shape = 's32[2]{0}', space=sflag, size = 0x8, scoped, tag = 'scoped memory for tpu_custom_call.1']
    #allocation4 [shape = 's32[2]{0}', space=sflag, size = 0x8, scoped, tag = 'scoped memory for tpu_custom_call.1']
    #allocation5 [shape = 's32[2]{0}', space=sflag, size = 0x8, scoped, tag = 'scoped memory for tpu_custom_call.1']
    #allocation6 [shape = 'u8[286720]{0}', space=vmem, size = 0x46000, scoped, tag = 'input window, operand 1']
    #allocation7 [shape = 'u8[286720]{0}', space=vmem, size = 0x46000, scoped, tag = 'output window, operand 0']
    %7 = vsyncpa [#allocation5], 0
    %8 = vsyncpa [#allocation3], 0
    %s9 = scalar_lea.sflag [#allocation3], 1
    %10 = vsyncpa %s9, 0
    %11 = vsyncpa [#allocation4], 0
    %s12 = scalar_lea.sflag [#allocation4], 1
    %13 = vsyncpa %s12, 0
    loop: start=0, step=1, limit=4
    $region2: #{tpu_custom_call.1} parent=1 // loop_pre_header
      _
    $region3: #{tpu_custom_call.1} parent=1 // loop_header
      %s15 = sphi 0, %s19
      %p16 = scmp.ge.s32.totalorder %s15, 4
      %s23 = sphi 0, %s23
      %s25 = sphi 0, %s23
      %s26 = sphi 0, %s25
      %s40 = sphi 0, %s26
      %s46 = sphi 0, %s48
      %s49 = sphi 0, %s46
      %s50 = sphi 0, %s49
      %s66 = sphi 0, %s50
      %s72 = sphi 0, %s74
      %s75 = sphi 0, %s72
      %s76 = sphi 0, %s75
      %s92 = sphi 0, %s76
    $region4: #{tpu_custom_call.1} parent=1 // loop_header_branch
      %18 = sbr.rel (%p16) target = $region8
    $region5: #{tpu_custom_call.1} parent=1 // loop_body
      %s20 = ssub.s32 %s15, 1
      %s21 = ssub.s32 %s15, 2
      %s22 = sadd.s32 %s15, 1
      %s24 = sadd.s32 %s23, 1
      %p27 = scmp.eq.s32.totalorder %s15, 1
      %p28 = scmp.ne.s32.totalorder %s23, %s25
      %p29 = scmp.eq.s32.totalorder %s15, 0
      %p30 = por %p28, %p29
      %p31 = scmp.ne.s32.totalorder %s23, %s25
      %p32 = scmp.eq.s32.totalorder %s20, 1
      %p33 = por %p31, %p32
      %p34 = scmp.ne.s32.totalorder %s25, %s26
      %p35 = scmp.eq.s32.totalorder %s20, 0
      %p36 = por %p34, %p35
      %p37 = scmp.ne.s32.totalorder %s25, %s26
      %p38 = scmp.eq.s32.totalorder %s21, 1
      %p39 = por %p37, %p38
      %p41 = scmp.ne.s32.totalorder %s26, %s40
      %p42 = scmp.eq.s32.totalorder %s21, 0
      %p43 = por %p41, %p42
      %s44 = ssub.s32 %s15, %s22
      %p45 = scmp.eq.s32.totalorder %s44, 0
      %s47 = sadd.s32 %s46, 1
      %s48 = scalar_select %p45, %s46, %s47
      %p51 = pneg %p45
      %p52 = scmp.eq.s32.totalorder %s15, 1
      %p53 = por %p51, %p52
      %p54 = scmp.ne.s32.totalorder %s46, %s49
      %p55 = scmp.eq.s32.totalorder %s15, 0
      %p56 = por %p54, %p55
      %p57 = scmp.ne.s32.totalorder %s46, %s49
      %p58 = scmp.eq.s32.totalorder %s20, 1
      %p59 = por %p57, %p58
      %p60 = scmp.ne.s32.totalorder %s49, %s50
      %p61 = scmp.eq.s32.totalorder %s20, 0
      %p62 = por %p60, %p61
      %p63 = scmp.ne.s32.totalorder %s49, %s50
      %p64 = scmp.eq.s32.totalorder %s21, 1
      %p65 = por %p63, %p64
      %p67 = scmp.ne.s32.totalorder %s50, %s66
      %p68 = scmp.eq.s32.totalorder %s21, 0
      %p69 = por %p67, %p68
      %s70 = ssub.s32 %s15, %s22
      %p71 = scmp.eq.s32.totalorder %s70, 0
      %s73 = sadd.s32 %s72, 1
      %s74 = scalar_select %p71, %s72, %s73
      %p77 = pneg %p71
      %p78 = scmp.eq.s32.totalorder %s15, 1
      %p79 = por %p77, %p78
      %p80 = scmp.ne.s32.totalorder %s72, %s75
      %p81 = scmp.eq.s32.totalorder %s15, 0
      %p82 = por %p80, %p81
      %p83 = scmp.ne.s32.totalorder %s72, %s75
      %p84 = scmp.eq.s32.totalorder %s20, 1
      %p85 = por %p83, %p84
      %p86 = scmp.ne.s32.totalorder %s75, %s76
      %p87 = scmp.eq.s32.totalorder %s20, 0
      %p88 = por %p86, %p87
      %p89 = scmp.ne.s32.totalorder %s75, %s76
      %p90 = scmp.eq.s32.totalorder %s21, 1
      %p91 = por %p89, %p90
      %p93 = scmp.ne.s32.totalorder %s76, %s92
      %p94 = scmp.eq.s32.totalorder %s21, 0
      %p95 = por %p93, %p94
      %p96 = scmp.le.s32.totalorder 1, %s15
      %p97 = scmp.lt.s32.totalorder %s15, 3
      %p98 = pnand %p96, %p97
      %p99 = pneg %p98
      // Predicated region
      $region9: #{tpu_custom_call.1} parent=5 // pred_check
        _
      $region10: #{tpu_custom_call.1} parent=5 // pred_check_branch
        %101 = sbr.rel (%p98) target = $region12
      $region11: #{tpu_custom_call.1} parent=5 // pred_region
        %s102 = ssub.s32 %s15, 1
        // Predicated region
        $region13: #{tpu_custom_call.1} parent=11 // pred_check
          %p103 = pneg %p36
        $region14: #{tpu_custom_call.1} parent=11 // pred_check_branch
          %105 = sbr.rel (%p103) target = $region16
        $region15: #{tpu_custom_call.1} parent=11 // pred_region
          %s107 = ssub.s32 16, 16
          %108 = vsyncadd [#allocation5], %s107
          %111 = dma.hbm_to_smem %s0, 16, [#allocation2], [#allocation5]
        $region16: #{tpu_custom_call.1} parent=11 // pred_fallthru
          _
      $region12: #{tpu_custom_call.1} parent=5 // pred_fallthru
        _
      %p112 = scmp.lt.s32.totalorder %s15, 2
      // Predicated region
      $region17: #{tpu_custom_call.1} parent=5 // pred_check
        %p113 = pneg %p112
      $region18: #{tpu_custom_call.1} parent=5 // pred_check_branch
        %115 = sbr.rel (%p113) target = $region20
      $region19: #{tpu_custom_call.1} parent=5 // pred_region
        // Predicated region
        $region21: #{tpu_custom_call.1} parent=19 // pred_check
          %p116 = pneg %p56
        $region22: #{tpu_custom_call.1} parent=19 // pred_check_branch
          %118 = sbr.rel (%p116) target = $region24
        $region23: #{tpu_custom_call.1} parent=19 // pred_region
          %s119 = sand.u32 %s46, 1
          %s120 = scalar_lea.sflag [#allocation3], %s119
          %s121 = sand.u32 %s46, 1
          %s122 = smul.addr %s121, 280
          %s123 = scalar_lea.vmem [#allocation6], %s122
          %s124 = smul.u32 35, %s15
          %s125 = ssub.s32 69, %s124
          %p126 = scmp.lt.s32.totalorder %s125, 35
          %s127 = scalar_select %p126, %s125, 35
          %s128 = smul.u32 128, %s127
          %s130 = ssub.s32 4480, %s128
          %131 = vsyncadd %s120, %s130
          %p132 = scmp.ne.s32.totalorder 0, %s128
          %s133 = smul.addr %s124, 128
          %s134 = scalar_lea.hbm %s1, %s133
          %s135 = smul.u32 8, %s127
          %s136 = sshll.u32 %s123, 4
          %s137 = int_to_ptr.vmem [resolvable:$true] %s136
          %s138 = sshll.u32 %s135, 4
          %142 = dma.hbm_to_vmem [thread:$0]  (%p132), %s134, %s138, %s137, %s120, 128, 128, 8
        $region24: #{tpu_custom_call.1} parent=19 // pred_fallthru
          _
      $region20: #{tpu_custom_call.1} parent=5 // pred_fallthru
        _
      %p143 = scmp.le.s32.totalorder 1, %s15
      %p144 = scmp.lt.s32.totalorder %s15, 3
      %p145 = pnand %p143, %p144
      %p146 = pneg %p145
      // Predicated region
      $region25: #{tpu_custom_call.1} parent=5 // pred_check
        _
      $region26: #{tpu_custom_call.1} parent=5 // pred_check_branch
        %148 = sbr.rel (%p145) target = $region28
      $region27: #{tpu_custom_call.1} parent=5 // pred_region
        %s149 = ssub.s32 %s15, 1
        // Predicated region
        $region29: #{tpu_custom_call.1} parent=27 // pred_check
          %p150 = pneg %p36
        $region30: #{tpu_custom_call.1} parent=27 // pred_check_branch
          %152 = sbr.rel (%p150) target = $region32
        $region31: #{tpu_custom_call.1} parent=27 // pred_region
          %153 = dma.done [#allocation5], 16
        $region32: #{tpu_custom_call.1} parent=27 // pred_fallthru
          _
        %s154 = sand.u32 %s49, 1
        %s155 = scalar_lea.sflag [#allocation3], %s154
        %s156 = sand.u32 %s49, 1
        %s157 = smul.addr %s156, 280
        %s158 = scalar_lea.vmem [#allocation6], %s157
        // Predicated region
        $region33: #{tpu_custom_call.1} parent=27 // pred_check
          %p159 = pneg %p62
        $region34: #{tpu_custom_call.1} parent=27 // pred_check_branch
          %161 = sbr.rel (%p159) target = $region36
        $region35: #{tpu_custom_call.1} parent=27 // pred_region
          %162 = dma.done %s155, 4480
        $region36: #{tpu_custom_call.1} parent=27 // pred_fallthru
          _
        %163 = sfence
        %p164 = pneg %p36
        %p165 = pneg %p33
        %s166 = sand.u32 %s49, 1
        %s167 = scalar_lea.sflag [#allocation3], %s166
        %s168 = sand.u32 %s49, 1
        %s169 = smul.addr %s168, 280
        %s170 = scalar_lea.vmem [#allocation6], %s169
        %p171 = pneg %p62
        %p172 = pneg %p59
        %p173 = pneg %p88
        %p174 = pneg %p85
        %s175 = sand.u32 %s75, 1
        %s176 = scalar_lea.sflag [#allocation4], %s175
        %s177 = sand.u32 %s75, 1
        %s178 = smul.addr %s177, 280
        %s179 = scalar_lea.vmem [#allocation7], %s178
        %s180 = smul.u32 35, %s20
        %s181 = ssub.s32 69, %s180
        %p182 = scmp.lt.s32.totalorder %s181, 35
        %s183 = scalar_select %p182, %s181, 35
        %s184 = smul.u32 128, %s183
        %s185 = smul.u32 35, %s20
        %s186 = ssub.s32 69, %s185
        %p187 = scmp.lt.s32.totalorder %s186, 35
        %s188 = scalar_select %p187, %s186, 35
        %s189 = smul.u32 128, %s188
        %v190 = vld [vmem:[%s158] sm:$0xff]
        %v191 = vld [vmem:[%s158 + $0x8] sm:$0xff]
        %v192 = vld [vmem:[%s158 + $0x10] sm:$0xff]
        %v193 = vld [vmem:[%s158 + $0x18] sm:$0xff]
        %v194 = vld [vmem:[%s158 + $0x20] sm:$0xff]
        %v195 = vld [vmem:[%s158 + $0x28] sm:$0xff]
        %v196 = vld [vmem:[%s158 + $0x30] sm:$0xff]
        %v197 = vld [vmem:[%s158 + $0x38] sm:$0xff]
        %v198 = vld [vmem:[%s158 + $0x40] sm:$0xff]
        %v199 = vld [vmem:[%s158 + $0x48] sm:$0xff]
        %v200 = vld [vmem:[%s158 + $0x50] sm:$0xff]
        %v201 = vld [vmem:[%s158 + $0x58] sm:$0xff]
        %v202 = vld [vmem:[%s158 + $0x60] sm:$0xff]
        %v203 = vld [vmem:[%s158 + $0x68] sm:$0xff]
        %v204 = vld [vmem:[%s158 + $0x70] sm:$0xff]
        %v205 = vld [vmem:[%s158 + $0x78] sm:$0xff]
        %v206 = vld [vmem:[%s158 + $0x80] sm:$0xff]
        %v207 = vld [vmem:[%s158 + $0x88] sm:$0xff]
        %v208 = vld [vmem:[%s158 + $0x90] sm:$0xff]
        %v209 = vld [vmem:[%s158 + $0x98] sm:$0xff]
        %v210 = vld [vmem:[%s158 + $0xa0] sm:$0xff]
        %v211 = vld [vmem:[%s158 + $0xa8] sm:$0xff]
        %v212 = vld [vmem:[%s158 + $0xb0] sm:$0xff]
        %v213 = vld [vmem:[%s158 + $0xb8] sm:$0xff]
        %v214 = vld [vmem:[%s158 + $0xc0] sm:$0xff]
        %v215 = vld [vmem:[%s158 + $0xc8] sm:$0xff]
        %v216 = vld [vmem:[%s158 + $0xd0] sm:$0xff]
        %v217 = vld [vmem:[%s158 + $0xd8] sm:$0xff]
        %v218 = vld [vmem:[%s158 + $0xe0] sm:$0xff]
        %v219 = vld [vmem:[%s158 + $0xe8] sm:$0xff]
        %v220 = vld [vmem:[%s158 + $0xf0] sm:$0xff]
        %v221 = vld [vmem:[%s158 + $0xf8] sm:$0xff]
        %v222 = vld [vmem:[%s158 + $0x100] sm:$0xff]
        %v223 = vld [vmem:[%s158 + $0x108] sm:$0xff]
        %v224 = vld [vmem:[%s158 + $0x110] sm:$0xff]
        %s225 = sld [smem:[#allocation2]]
        %v226 = vstv %s225
        %v227 = vmul.f32 %v190, %v226
        %v228 = vmul.f32 %v191, %v226
        %v229 = vmul.f32 %v192, %v226
        %v230 = vmul.f32 %v193, %v226
        %v231 = vmul.f32 %v194, %v226
        %v232 = vmul.f32 %v195, %v226
        %v233 = vmul.f32 %v196, %v226
        %v234 = vmul.f32 %v197, %v226
        %v235 = vmul.f32 %v198, %v226
        %v236 = vmul.f32 %v199, %v226
        %v237 = vmul.f32 %v200, %v226
        %v238 = vmul.f32 %v201, %v226
        %v239 = vmul.f32 %v202, %v226
        %v240 = vmul.f32 %v203, %v226
        %v241 = vmul.f32 %v204, %v226
        %v242 = vmul.f32 %v205, %v226
        %v243 = vmul.f32 %v206, %v226
        %v244 = vmul.f32 %v207, %v226
        %v245 = vmul.f32 %v208, %v226
        %v246 = vmul.f32 %v209, %v226
        %v247 = vmul.f32 %v210, %v226
        %v248 = vmul.f32 %v211, %v226
        %v249 = vmul.f32 %v212, %v226
        %v250 = vmul.f32 %v213, %v226
        %v251 = vmul.f32 %v214, %v226
        %v252 = vmul.f32 %v215, %v226
        %v253 = vmul.f32 %v216, %v226
        %v254 = vmul.f32 %v217, %v226
        %v255 = vmul.f32 %v218, %v226
        %v256 = vmul.f32 %v219, %v226
        %v257 = vmul.f32 %v220, %v226
        %v258 = vmul.f32 %v221, %v226
        %v259 = vmul.f32 %v222, %v226
        %v260 = vmul.f32 %v223, %v226
        %v261 = vmul.f32 %v224, %v226
        %s262 = sld [smem:[#allocation2 + $0x1]]
        %v263 = vstv %s262
        %v264 = vadd.f32 %v227, %v263
        %v265 = vadd.f32 %v228, %v263
        %v266 = vadd.f32 %v229, %v263
        %v267 = vadd.f32 %v230, %v263
        %v268 = vadd.f32 %v231, %v263
        %v269 = vadd.f32 %v232, %v263
        %v270 = vadd.f32 %v233, %v263
        %v271 = vadd.f32 %v234, %v263
        %v272 = vadd.f32 %v235, %v263
        %v273 = vadd.f32 %v236, %v263
        %v274 = vadd.f32 %v237, %v263
        %v275 = vadd.f32 %v238, %v263
        %v276 = vadd.f32 %v239, %v263
        %v277 = vadd.f32 %v240, %v263
        %v278 = vadd.f32 %v241, %v263
        %v279 = vadd.f32 %v242, %v263
        %v280 = vadd.f32 %v243, %v263
        %v281 = vadd.f32 %v244, %v263
        %v282 = vadd.f32 %v245, %v263
        %v283 = vadd.f32 %v246, %v263
        %v284 = vadd.f32 %v247, %v263
        %v285 = vadd.f32 %v248, %v263
        %v286 = vadd.f32 %v249, %v263
        %v287 = vadd.f32 %v250, %v263
        %v288 = vadd.f32 %v251, %v263
        %v289 = vadd.f32 %v252, %v263
        %v290 = vadd.f32 %v253, %v263
        %v291 = vadd.f32 %v254, %v263
        %v292 = vadd.f32 %v255, %v263
        %v293 = vadd.f32 %v256, %v263
        %v294 = vadd.f32 %v257, %v263
        %v295 = vadd.f32 %v258, %v263
        %v296 = vadd.f32 %v259, %v263
        %v297 = vadd.f32 %v260, %v263
        %v298 = vadd.f32 %v261, %v263
        %299 = vst [vmem:[%s179] sm:$0xff] %v264
        %300 = vst [vmem:[%s179 + $0x8] sm:$0xff] %v265
        %301 = vst [vmem:[%s179 + $0x10] sm:$0xff] %v266
        %302 = vst [vmem:[%s179 + $0x18] sm:$0xff] %v267
        %303 = vst [vmem:[%s179 + $0x20] sm:$0xff] %v268
        %304 = vst [vmem:[%s179 + $0x28] sm:$0xff] %v269
        %305 = vst [vmem:[%s179 + $0x30] sm:$0xff] %v270
        %306 = vst [vmem:[%s179 + $0x38] sm:$0xff] %v271
        %307 = vst [vmem:[%s179 + $0x40] sm:$0xff] %v272
        %308 = vst [vmem:[%s179 + $0x48] sm:$0xff] %v273
        %309 = vst [vmem:[%s179 + $0x50] sm:$0xff] %v274
        %310 = vst [vmem:[%s179 + $0x58] sm:$0xff] %v275
        %311 = vst [vmem:[%s179 + $0x60] sm:$0xff] %v276
        %312 = vst [vmem:[%s179 + $0x68] sm:$0xff] %v277
        %313 = vst [vmem:[%s179 + $0x70] sm:$0xff] %v278
        %314 = vst [vmem:[%s179 + $0x78] sm:$0xff] %v279
        %315 = vst [vmem:[%s179 + $0x80] sm:$0xff] %v280
        %316 = vst [vmem:[%s179 + $0x88] sm:$0xff] %v281
        %317 = vst [vmem:[%s179 + $0x90] sm:$0xff] %v282
        %318 = vst [vmem:[%s179 + $0x98] sm:$0xff] %v283
        %319 = vst [vmem:[%s179 + $0xa0] sm:$0xff] %v284
        %320 = vst [vmem:[%s179 + $0xa8] sm:$0xff] %v285
        %321 = vst [vmem:[%s179 + $0xb0] sm:$0xff] %v286
        %322 = vst [vmem:[%s179 + $0xb8] sm:$0xff] %v287
        %323 = vst [vmem:[%s179 + $0xc0] sm:$0xff] %v288
        %324 = vst [vmem:[%s179 + $0xc8] sm:$0xff] %v289
        %325 = vst [vmem:[%s179 + $0xd0] sm:$0xff] %v290
        %326 = vst [vmem:[%s179 + $0xd8] sm:$0xff] %v291
        %327 = vst [vmem:[%s179 + $0xe0] sm:$0xff] %v292
        %328 = vst [vmem:[%s179 + $0xe8] sm:$0xff] %v293
        %329 = vst [vmem:[%s179 + $0xf0] sm:$0xff] %v294
        %330 = vst [vmem:[%s179 + $0xf8] sm:$0xff] %v295
        %331 = vst [vmem:[%s179 + $0x100] sm:$0xff] %v296
        %332 = vst [vmem:[%s179 + $0x108] sm:$0xff] %v297
        %333 = vst [vmem:[%s179 + $0x110] sm:$0xff] %v298
        %s334 = sand.u32 %s75, 1
        %s335 = scalar_lea.sflag [#allocation4], %s334
        %s336 = sand.u32 %s75, 1
        %s337 = smul.addr %s336, 280
        %s338 = scalar_lea.vmem [#allocation7], %s337
        // Predicated region
        $region37: #{tpu_custom_call.1} parent=27 // pred_check
          %p339 = pneg %p85
        $region38: #{tpu_custom_call.1} parent=27 // pred_check_branch
          %341 = sbr.rel (%p339) target = $region40
        $region39: #{tpu_custom_call.1} parent=27 // pred_region
          %s342 = smul.u32 35, %s20
          %s343 = ssub.s32 69, %s342
          %p344 = scmp.lt.s32.totalorder %s343, 35
          %s345 = scalar_select %p344, %s343, 35
          %s346 = smul.u32 128, %s345
          %s348 = ssub.s32 4480, %s346
          %349 = vsyncadd %s335, %s348
          %p350 = scmp.ne.s32.totalorder 0, %s346
          %s351 = smul.addr %s342, 128
          %s352 = scalar_lea.hbm %s2, %s351
          %s353 = smul.u32 8, %s345
          %s354 = sshll.u32 %s338, 4
          %s355 = int_to_ptr.vmem [resolvable:$true] %s354
          %s356 = sshll.u32 %s353, 4
          %360 = dma.vmem_to_hbm [thread:$0]  (%p350), %s355, %s356, %s352, %s335, 128, 128, 8
        $region40: #{tpu_custom_call.1} parent=27 // pred_fallthru
          _
      $region28: #{tpu_custom_call.1} parent=5 // pred_fallthru
        _
      %p361 = scmp.le.s32.totalorder 2, %s15
      // Predicated region
      $region41: #{tpu_custom_call.1} parent=5 // pred_check
        %p362 = pneg %p361
      $region42: #{tpu_custom_call.1} parent=5 // pred_check_branch
        %364 = sbr.rel (%p362) target = $region44
      $region43: #{tpu_custom_call.1} parent=5 // pred_region
        %s365 = ssub.s32 %s15, 2
        // Predicated region
        $region45: #{tpu_custom_call.1} parent=43 // pred_check
          %p366 = pneg %p91
        $region46: #{tpu_custom_call.1} parent=43 // pred_check_branch
          %368 = sbr.rel (%p366) target = $region48
        $region47: #{tpu_custom_call.1} parent=43 // pred_region
          %s369 = sand.u32 %s76, 1
          %s370 = scalar_lea.sflag [#allocation4], %s369
          %s371 = sand.u32 %s76, 1
          %s372 = smul.addr %s371, 280
          %s373 = scalar_lea.vmem [#allocation7], %s372
          %374 = dma.done %s370, 4480
        $region48: #{tpu_custom_call.1} parent=43 // pred_fallthru
          _
      $region44: #{tpu_custom_call.1} parent=5 // pred_fallthru
        _
    $region6: #{tpu_custom_call.1} parent=1 // loop_footer
      %s19 = sadd.s32 1, %s15
    $region7: #{tpu_custom_call.1} parent=1 // loop_footer_branch
      %14 = sbr.rel target = $region3
    $region8: #{tpu_custom_call.1} parent=1 // loop_exit
      _
    %375 = vsyncpa [#allocation3], 1
    %s376 = scalar_lea.sflag [#allocation3], 1
    %377 = vsyncpa %s376, 1
    %378 = vsyncpa [#allocation4], 1
    %s379 = scalar_lea.sflag [#allocation4], 1
    %380 = vsyncpa %s379, 1
    %381 = vsyncpa [#allocation5], 1
    %s382 = scalar_lea.sflag [#allocation5], 1
    %383 = vsyncpa %s382, 1

</llo_original>
